<compile_context>
chip_gen: v7x
topology: tpu7x:2x2x1
jax: 0.10.0
libtpu: 0.0.40
codegen_flags: <defaults>
</compile_context>

<pallas_src>
import jax
import jax.numpy as jnp
from jax.experimental import pallas as pl
from jax.experimental.pallas import tpu as pltpu


def _nll_partial_kernel(logp_ref, tgt_ref, acc_ref):
    """Accumulate per-shard partial sums of the selected log-probabilities."""
    i = pl.program_id(1)  # row-tile index (reduction axis, last in grid)

    @pl.when(i == 0)
    def _init():
        acc_ref[...] = jnp.zeros_like(acc_ref)

    # In-kernel upcast: bf16 inputs are converted on the VPU, not via an
    # extra XLA convert pass over HBM.
    logp = logp_ref[...].astype(jnp.float32)            # (TILE_N, C)
    tgt = tgt_ref[...]                                   # (TILE_N, 1) int32
    tile_n, c = logp.shape

    # Gather-free per-row select: one-hot compare on the class (lane) dim.
    # Padded rows carry target = -1 and therefore never match any column.
    col = jax.lax.broadcasted_iota(jnp.int32, (tile_n, c), 1)
    picked = jnp.where(col == tgt, logp, 0.0)            # (TILE_N, C) f32

    # Deferred reduction: fold the row-tile into the resident (8, C) output
    # block with elementwise (VALU) adds only; no per-tile XLU reduce.
    acc_ref[...] += picked.reshape(tile_n // 8, 8, c).sum(axis=0)


def _choose_tile_n(n_rows: int, n_cols: int, itemsize: int) -> int:
    """~4 MiB per (TILE_N, C) input block, rows a multiple of 16, >= 16."""
    target_block_bytes = 4 * 1024 * 1024
    t = target_block_bytes // max(1, n_cols * itemsize)
    t = int(min(max(t, 16), 1024))
    t -= t % 16
    # No point using a tile far larger than one core's share of the rows.
    per_core = -(-n_rows // 2)
    per_core16 = ((per_core + 15) // 16) * 16
    return max(16, min(t, per_core16))


def nll_loss(output: jax.Array, target: jax.Array) -> jax.Array:
    """output: (N, C) float32/bfloat16 log-probs; target: (N,) int class ids."""
    n, c = output.shape
    itemsize = jnp.dtype(output.dtype).itemsize

    tile_n = _choose_tile_n(n, c, itemsize)
    n_inner = max(1, pl.cdiv(n, 2 * tile_n))   # row-tiles per parallel shard
    n_pad = 2 * n_inner * tile_n               # padded row count

    tgt2d = target.astype(jnp.int32).reshape(n, 1)
    if n_pad != n:
        # No-op when N already divides evenly; padded rows get target = -1 so
        # they contribute exactly zero to the sum.
        output = jnp.pad(output, ((0, n_pad - n), (0, 0)))
        tgt2d = jnp.pad(tgt2d, ((0, n_pad - n), (0, 0)), constant_values=-1)

    # VMEM budget: 2x double-buffered input blocks + target blocks + out block.
    block_bytes = tile_n * c * itemsize
    vmem_need = 2 * block_bytes + 2 * tile_n * 4 + 2 * 8 * c * 4
    vmem_limit = int(min(64 * 2**20, max(2 * vmem_need, 32 * 2**20)))

    partials = pl.pallas_call(
        _nll_partial_kernel,
        out_shape=jax.ShapeDtypeStruct((2 * 8, c), jnp.float32),
        grid=(2, n_inner),
        in_specs=[
            pl.BlockSpec((tile_n, c), lambda p, i: (p * n_inner + i, 0)),
            pl.BlockSpec((tile_n, 1), lambda p, i: (p * n_inner + i, 0)),
        ],
        out_specs=pl.BlockSpec((8, c), lambda p, i: (p, 0)),
        compiler_params=pltpu.CompilerParams(
            dimension_semantics=("parallel", "arbitrary"),
            vmem_limit_bytes=vmem_limit,
        ),
        cost_estimate=pl.CostEstimate(
            flops=3 * n_pad * c,
            transcendentals=0,
            bytes_accessed=n_pad * c * itemsize + n_pad * 4 + 16 * c * 4,
        ),
    )(output, tgt2d)

    # Final tiny reduce (16*C values) + mean over the *true* row count.
    return -jnp.sum(partials) / jnp.float32(n)


if __name__ == "__main__":
    key = jax.random.PRNGKey(0)
    k_logits, k_tgt = jax.random.split(key)

    N, C = 24, 32  # small, exercises row padding and both parallel shards
    logits = jax.random.normal(k_logits, (N, C), dtype=jnp.float32)
    log_probs = jax.nn.log_softmax(logits, axis=-1)   # nll_loss expects log-probs
    target = jax.random.randint(k_tgt, (N,), 0, C, dtype=jnp.int32)

    loss = nll_loss(log_probs, target)
    jax.block_until_ready(loss)

    # Reference check (same semantics as F.nll_loss, mean reduction).
    ref = -jnp.mean(log_probs[jnp.arange(N), target])
    assert jnp.allclose(loss, ref, atol=1e-6, rtol=1e-6), (loss, ref)

    print("KERNEL_OK")
</pallas_src>

<mosaic_0001>
module attributes {stable_mosaic.version = 11 : i64} {
  func.func @_nll_partial_kernel(%arg0: i32, %arg1: i32, %arg2: memref<16x32xf32, #tpu.memory_space<vmem>>, %arg3: memref<16x1xi32, #tpu.memory_space<vmem>>, %arg4: memref<8x32xf32, #tpu.memory_space<vmem>>) attributes {dimension_semantics = [#tpu.dimension_semantics<parallel>, #tpu.dimension_semantics<arbitrary>], iteration_bounds = array<i64: 2, 1>, scalar_prefetch = 0 : i64, scratch_operands = 0 : i64, tpu.core_type = #tpu.core_type<tc>, window_params = [{transform_indices = @transform_0, window_bounds = array<i64: 16, 32>}, {transform_indices = @transform_1, window_bounds = array<i64: 16, 1>}, {transform_indices = @transform_2, window_bounds = array<i64: 8, 32>}]} {
    %c0_i32 = arith.constant 0 : i32
    %0 = arith.cmpi eq, %arg1, %c0_i32 : i32
    %1 = arith.extui %0 : i1 to i32
    %c0_i32_0 = arith.constant 0 : i32
    %2 = arith.cmpi ne, %1, %c0_i32_0 : i32
    scf.if %2 {
      %cst_9 = arith.constant 0.000000e+00 : f32
      %15 = vector.broadcast %cst_9 : f32 to vector<8x32xf32>
      %c0_10 = arith.constant 0 : index
      %c0_11 = arith.constant 0 : index
      %16 = vector.load %arg4[%c0_10, %c0_11] : memref<8x32xf32, #tpu.memory_space<vmem>>, vector<8x32xf32>
      tpu.vector_store %arg4[%c0_10, %c0_11], %15 {strides = array<i32>} : memref<8x32xf32, #tpu.memory_space<vmem>>, vector<8x32xf32>,
    } else {
    }
    %c0 = arith.constant 0 : index
    %c0_1 = arith.constant 0 : index
    %3 = vector.load %arg2[%c0, %c0_1] : memref<16x32xf32, #tpu.memory_space<vmem>>, vector<16x32xf32>
    %c0_2 = arith.constant 0 : index
    %c0_3 = arith.constant 0 : index
    %4 = vector.load %arg3[%c0_2, %c0_3] : memref<16x1xi32, #tpu.memory_space<vmem>>, vector<16x1xi32>
    %5 = tpu.iota {dimensions = array<i32: 1>} : vector<16x32xi32>
    %6 = vector.broadcast %4 : vector<16x1xi32> to vector<16x32xi32>
    %7 = arith.cmpi eq, %5, %6 : vector<16x32xi32>
    %cst = arith.constant 0.000000e+00 : f32
    %8 = vector.broadcast %cst : f32 to vector<16x32xf32>
    %9 = arith.select %7, %3, %8 : vector<16x32xi1>, vector<16x32xf32>
    %c0_4 = arith.constant 0 : index
    %c0_5 = arith.constant 0 : index
    %10 = vector.load %arg4[%c0_4, %c0_5] : memref<8x32xf32, #tpu.memory_space<vmem>>, vector<8x32xf32>
    %11 = vector.shape_cast %9 : vector<16x32xf32> to vector<2x8x32xf32>
    %cst_6 = arith.constant dense<0.000000e+00> : vector<8x32xf32>
    %12 = vector.multi_reduction <add>, %11, %cst_6 [0] : vector<2x8x32xf32> to vector<8x32xf32>
    %13 = arith.addf %10, %12 : vector<8x32xf32>
    %c0_7 = arith.constant 0 : index
    %c0_8 = arith.constant 0 : index
    %14 = vector.load %arg4[%c0_7, %c0_8] : memref<8x32xf32, #tpu.memory_space<vmem>>, vector<8x32xf32>
    tpu.vector_store %arg4[%c0_7, %c0_8], %13 {strides = array<i32>} : memref<8x32xf32, #tpu.memory_space<vmem>>, vector<8x32xf32>,
    return
  }
  func.func @transform_0(%arg0: i32, %arg1: i32) -> (i32, i32) {
    %c1_i32 = arith.constant 1 : i32
    %0 = arith.muli %arg0, %c1_i32 : i32
    %1 = arith.addi %0, %arg1 : i32
    %c0_i32 = arith.constant 0 : i32
    %c0_i32_0 = arith.constant 0 : i32
    return %1, %c0_i32 : i32, i32
  }
  func.func @transform_1(%arg0: i32, %arg1: i32) -> (i32, i32) {
    %c1_i32 = arith.constant 1 : i32
    %0 = arith.muli %arg0, %c1_i32 : i32
    %1 = arith.addi %0, %arg1 : i32
    %c0_i32 = arith.constant 0 : i32
    %c0_i32_0 = arith.constant 0 : i32
    return %1, %c0_i32 : i32, i32
  }
  func.func @transform_2(%arg0: i32, %arg1: i32) -> (i32, i32) {
    %c0_i32 = arith.constant 0 : i32
    %c0_i32_0 = arith.constant 0 : i32
    return %arg0, %c0_i32 : i32, i32
  }
}

</mosaic_0001>

<llo_original>
// kernel: tpu_custom_call.1
$region0: #{tpu_custom_call.1}
  #allocation0 [shape = 'u32[]', space=smem, size = 0x4, offset = 0x4, fixed_abs, tag = 'smem constant byte address 0x4 - core index']
  #allocation1 [shape = 'u32[144,128]{1,0:T(1,128)}', space=vmem, size = 0x12000, scoped, tag = 'internal scratch']
  %s0 = inlined_call_operand.vmem [shape: f32[32,32], index: 0, kind: input, shape index: {}]
  %s1 = inlined_call_operand.vmem [shape: s32[32,1], index: 1, kind: input, shape index: {}]
  %s2 = inlined_call_operand.hbm [shape: f32[16,32], index: 2, kind: output, shape index: {}]
  %s3 = sld [smem:[#allocation0]]
  $region45: #{tpu_custom_call.1} parent=0
    _
  %s5 = ssub.s32 1, %s3
  %s6 = scalar_select 0, %s5, %s3
  $region1: #{tpu_custom_call.1} parent=0
    #allocation2 [shape = 'u8[8192]{0}', space=vmem, size = 0x2000, scoped, tag = 'output window, operand 0']
    #allocation3 [shape = 's32[2]{0}', space=sflag, size = 0x8, scoped, tag = 'scoped memory for tpu_custom_call.1']
    %7 = vsyncpa [#allocation3], 0
    %s8 = scalar_lea.sflag [#allocation3], 1
    %9 = vsyncpa %s8, 0
    loop: start=0, step=1, limit=4
    $region2: #{tpu_custom_call.1} parent=1 // loop_pre_header
      _
    $region3: #{tpu_custom_call.1} parent=1 // loop_header
      %s11 = sphi 0, %s15
      %p12 = scmp.ge.s32.totalorder %s11, 4
      %s18 = sphi 0, %s30
      %s19 = sphi 0, %s26
      %s20 = sphi 0, %s18
      %s21 = sphi 0, %s19
      %s22 = sphi 0, %s20
      %s23 = sphi 0, %s21
      %s35 = sphi 0, %s37
      %s38 = sphi 0, %s35
      %s39 = sphi 0, %s38
      %s55 = sphi 0, %s39
      %s63 = sphi 0, %s65
      %s66 = sphi 0, %s63
      %s67 = sphi 0, %s66
      %s83 = sphi 0, %s67
      %s89 = sphi 0, %s91
      %s92 = sphi 0, %s89
      %s93 = sphi 0, %s92
      %s109 = sphi 0, %s93
    $region4: #{tpu_custom_call.1} parent=1 // loop_header_branch
      %14 = sbr.rel (%p12) target = $region8
    $region5: #{tpu_custom_call.1} parent=1 // loop_body
      %s16 = ssub.s32 %s11, 1
      %s17 = ssub.s32 %s11, 2
      %s24 = sadd.s32 1, %s19
      %p25 = scmp.ge.s32.totalorder %s24, 1
      %s26 = scalar_select %p25, 0, %s24
      %s27 = sadd.s32 1, %s18
      %s28 = scalar_select %p25, %s27, %s18
      %p29 = scmp.ge.s32.totalorder %s28, 2
      %s30 = scalar_select %p29, 0, %s28
      %s31 = sadd.s32 %s18, %s19
      %s32 = sadd.s32 %s30, %s26
      %s33 = ssub.s32 %s31, %s32
      %p34 = scmp.eq.s32.totalorder %s33, 0
      %s36 = sadd.s32 %s35, 1
      %s37 = scalar_select %p34, %s35, %s36
      %p40 = pneg %p34
      %p41 = scmp.eq.s32.totalorder %s11, 1
      %p42 = por %p40, %p41
      %p43 = scmp.ne.s32.totalorder %s35, %s38
      %p44 = scmp.eq.s32.totalorder %s11, 0
      %p45 = por %p43, %p44
      %p46 = scmp.ne.s32.totalorder %s35, %s38
      %p47 = scmp.eq.s32.totalorder %s16, 1
      %p48 = por %p46, %p47
      %p49 = scmp.ne.s32.totalorder %s38, %s39
      %p50 = scmp.eq.s32.totalorder %s16, 0
      %p51 = por %p49, %p50
      %p52 = scmp.ne.s32.totalorder %s38, %s39
      %p53 = scmp.eq.s32.totalorder %s17, 1
      %p54 = por %p52, %p53
      %p56 = scmp.ne.s32.totalorder %s39, %s55
      %p57 = scmp.eq.s32.totalorder %s17, 0
      %p58 = por %p56, %p57
      %s59 = sadd.s32 %s18, %s19
      %s60 = sadd.s32 %s30, %s26
      %s61 = ssub.s32 %s59, %s60
      %p62 = scmp.eq.s32.totalorder %s61, 0
      %s64 = sadd.s32 %s63, 1
      %s65 = scalar_select %p62, %s63, %s64
      %p68 = pneg %p62
      %p69 = scmp.eq.s32.totalorder %s11, 1
      %p70 = por %p68, %p69
      %p71 = scmp.ne.s32.totalorder %s63, %s66
      %p72 = scmp.eq.s32.totalorder %s11, 0
      %p73 = por %p71, %p72
      %p74 = scmp.ne.s32.totalorder %s63, %s66
      %p75 = scmp.eq.s32.totalorder %s16, 1
      %p76 = por %p74, %p75
      %p77 = scmp.ne.s32.totalorder %s66, %s67
      %p78 = scmp.eq.s32.totalorder %s16, 0
      %p79 = por %p77, %p78
      %p80 = scmp.ne.s32.totalorder %s66, %s67
      %p81 = scmp.eq.s32.totalorder %s17, 1
      %p82 = por %p80, %p81
      %p84 = scmp.ne.s32.totalorder %s67, %s83
      %p85 = scmp.eq.s32.totalorder %s17, 0
      %p86 = por %p84, %p85
      %s87 = ssub.s32 %s18, %s30
      %p88 = scmp.eq.s32.totalorder %s87, 0
      %s90 = sadd.s32 %s89, 1
      %s91 = scalar_select %p88, %s89, %s90
      %p94 = pneg %p88
      %p95 = scmp.eq.s32.totalorder %s11, 1
      %p96 = por %p94, %p95
      %p97 = scmp.ne.s32.totalorder %s89, %s92
      %p98 = scmp.eq.s32.totalorder %s11, 0
      %p99 = por %p97, %p98
      %p100 = scmp.ne.s32.totalorder %s89, %s92
      %p101 = scmp.eq.s32.totalorder %s16, 1
      %p102 = por %p100, %p101
      %p103 = scmp.ne.s32.totalorder %s92, %s93
      %p104 = scmp.eq.s32.totalorder %s16, 0
      %p105 = por %p103, %p104
      %p106 = scmp.ne.s32.totalorder %s92, %s93
      %p107 = scmp.eq.s32.totalorder %s17, 1
      %p108 = por %p106, %p107
      %p110 = scmp.ne.s32.totalorder %s93, %s109
      %p111 = scmp.eq.s32.totalorder %s17, 0
      %p112 = por %p110, %p111
      %p113 = scmp.le.s32.totalorder 1, %s11
      %p114 = scmp.lt.s32.totalorder %s11, 3
      %p115 = pnand %p113, %p114
      %p116 = pneg %p115
      // Predicated region
      $region9: #{tpu_custom_call.1} parent=5 // pred_check
        _
      $region10: #{tpu_custom_call.1} parent=5 // pred_check_branch
        %118 = sbr.rel (%p115) target = $region12
      $region11: #{tpu_custom_call.1} parent=5 // pred_region
        %s119 = ssub.s32 %s11, 1
      $region12: #{tpu_custom_call.1} parent=5 // pred_fallthru
        _
      %p120 = scmp.lt.s32.totalorder %s11, 2
      // Predicated region
      $region13: #{tpu_custom_call.1} parent=5 // pred_check
        %p121 = pneg %p120
      $region14: #{tpu_custom_call.1} parent=5 // pred_check_branch
        %123 = sbr.rel (%p121) target = $region16
      $region15: #{tpu_custom_call.1} parent=5 // pred_region
        // Predicated region
        $region17: #{tpu_custom_call.1} parent=15 // pred_check
          %p124 = pneg %p45
        $region18: #{tpu_custom_call.1} parent=15 // pred_check_branch
          %126 = sbr.rel (%p124) target = $region20
        $region19: #{tpu_custom_call.1} parent=15 // pred_region
          %s127 = sadd.s32 %s18, %s19
          %s128 = smul.u32 2, %s127
          %p129 = scmp.lt.s32.totalorder %s128, 3
          %s130 = scalar_select %p129, %s128, 3
          %s131 = smul.addr %s130, 8
          %s132 = scalar_lea.vmem %s0, %s131
          %s133 = sadd.s32 %s18, %s19
          %s134 = smul.u32 2, %s133
        $region20: #{tpu_custom_call.1} parent=15 // pred_fallthru
          _
        // Predicated region
        $region21: #{tpu_custom_call.1} parent=15 // pred_check
          %p135 = pneg %p73
        $region22: #{tpu_custom_call.1} parent=15 // pred_check_branch
          %137 = sbr.rel (%p135) target = $region24
        $region23: #{tpu_custom_call.1} parent=15 // pred_region
          %s138 = sadd.s32 %s18, %s19
          %s139 = smul.u32 2, %s138
          %p140 = scmp.lt.s32.totalorder %s139, 3
          %s141 = scalar_select %p140, %s139, 3
          %s142 = smul.addr %s141, 8
          %s143 = scalar_lea.vmem %s1, %s142
          %s144 = sadd.s32 %s18, %s19
          %s145 = smul.u32 2, %s144
        $region24: #{tpu_custom_call.1} parent=15 // pred_fallthru
          _
      $region16: #{tpu_custom_call.1} parent=5 // pred_fallthru
        _
      %p146 = scmp.le.s32.totalorder 1, %s11
      %p147 = scmp.lt.s32.totalorder %s11, 3
      %p148 = pnand %p146, %p147
      %p149 = pneg %p148
      // Predicated region
      $region25: #{tpu_custom_call.1} parent=5 // pred_check
        _
      $region26: #{tpu_custom_call.1} parent=5 // pred_check_branch
        %151 = sbr.rel (%p148) target = $region28
      $region27: #{tpu_custom_call.1} parent=5 // pred_region
        %s152 = ssub.s32 %s11, 1
        %s153 = sadd.s32 %s20, %s21
        %s154 = smul.u32 2, %s153
        %p155 = scmp.lt.s32.totalorder %s154, 3
        %s156 = scalar_select %p155, %s154, 3
        %s157 = smul.addr %s156, 8
        %s158 = scalar_lea.vmem %s0, %s157
        %p159 = pneg %p51
        %p160 = pneg %p48
        %s161 = sadd.s32 %s20, %s21
        %s162 = smul.u32 2, %s161
        %p163 = scmp.lt.s32.totalorder %s162, 3
        %s164 = scalar_select %p163, %s162, 3
        %s165 = smul.addr %s164, 8
        %s166 = scalar_lea.vmem %s1, %s165
        %p167 = pneg %p79
        %p168 = pneg %p76
        %p169 = pneg %p105
        %p170 = pneg %p102
        %s171 = sand.u32 %s92, 1
        %s172 = scalar_lea.sflag [#allocation3], %s171
        %s173 = sand.u32 %s92, 1
        %s174 = smul.addr %s173, 8
        %s175 = scalar_lea.vmem [#allocation2], %s174
        %s176 = sadd.s32 %s20, %s21
        %s177 = smul.u32 2, %s176
        %p178 = scmp.lt.s32.totalorder %s177, 3
        %s179 = scalar_select %p178, %s177, 3
        %s180 = smul.addr %s179, 8
        %s181 = scalar_lea.vmem %s0, %s180
        %s182 = sadd.s32 %s20, %s21
        %s183 = smul.u32 2, %s182
        %s184 = sadd.s32 %s20, %s21
        %s185 = smul.u32 2, %s184
        %p186 = scmp.lt.s32.totalorder %s185, 3
        %s187 = scalar_select %p186, %s185, 3
        %s188 = smul.addr %s187, 8
        %s189 = scalar_lea.vmem %s1, %s188
        %s190 = sadd.s32 %s20, %s21
        %s191 = smul.u32 2, %s190
        %p192 = scmp.eq.s32.totalorder %s21, 0
        // Predicated region
        $region29: #{tpu_custom_call.1} parent=27 // pred_check
          %p193 = pneg %p192
        $region30: #{tpu_custom_call.1} parent=27 // pred_check_branch
          %195 = sbr.rel (%p193) target = $region32
        $region31: #{tpu_custom_call.1} parent=27 // pred_region
          %vm196 = vcmask 261120
          %197 = vst.msk [vmem:[%s175] sm:$0xff] %vm196, 0.0
        $region32: #{tpu_custom_call.1} parent=27 // pred_fallthru
          _
        %v198 = vld [vmem:[%s181] sm:$0xff]
        %v199 = vld [vmem:[%s181 + $0x8] sm:$0xff]
        %v200 = vld [vmem:[%s189] sm:$0xff]
        %v201 = vld [vmem:[%s189 + $0x8] sm:$0xff]
        %v202 = vlaneseq
        %v203 = vand.u32 %v202, 127
        %204 = vset.pattern.permute.xlu0 0
        %205 = vperm.xlu0 %204, %v200
        %v206 = vpop.permute.xlu0 %205
        %207 = vset.pattern.permute.xlu0 0
        %208 = vperm.xlu0 %207, %v201
        %v209 = vpop.permute.xlu0 %208
        %vm210 = vcmp.eq.s32.totalorder %v203, %v206
        %vm211 = vcmp.eq.s32.totalorder %v203, %v209
        %v212 = vsel %vm210, %v198, 0.0
        %v213 = vsel %vm211, %v199, 0.0
        %v214 = vld [vmem:[%s175] sm:$0xff]
        %vm215 = vcmask 261120
        %v216 = vsel %vm215, %v212, 0.0
        %v217 = vsel %vm215, %v213, 0.0
        %v218 = vadd.f32 %v216, %v217
        %v219 = vadd.f32 %v214, %v218
        %220 = vst.msk [vmem:[%s175] sm:$0xff] %vm215, %v219
        %s221 = sand.u32 %s92, 1
        %s222 = scalar_lea.sflag [#allocation3], %s221
        %s223 = sand.u32 %s92, 1
        %s224 = smul.addr %s223, 8
        %s225 = scalar_lea.vmem [#allocation2], %s224
        // Predicated region
        $region33: #{tpu_custom_call.1} parent=27 // pred_check
          %p226 = pneg %p102
        $region34: #{tpu_custom_call.1} parent=27 // pred_check_branch
          %228 = sbr.rel (%p226) target = $region36
        $region35: #{tpu_custom_call.1} parent=27 // pred_region
          %s230 = ssub.s32 128, 128
          %231 = vsyncadd %s222, %s230
          %s232 = smul.addr %s20, 128
          %s233 = scalar_lea.hbm %s2, %s232
          %s235 = sshll.u32 %s225, 4
          %s236 = int_to_ptr.vmem [resolvable:$true] %s235
          %238 = dma.vmem_to_hbm [thread:$0]  %s236, 128, %s233, %s222
        $region36: #{tpu_custom_call.1} parent=27 // pred_fallthru
          _
      $region28: #{tpu_custom_call.1} parent=5 // pred_fallthru
        _
      %p239 = scmp.le.s32.totalorder 2, %s11
      // Predicated region
      $region37: #{tpu_custom_call.1} parent=5 // pred_check
        %p240 = pneg %p239
      $region38: #{tpu_custom_call.1} parent=5 // pred_check_branch
        %242 = sbr.rel (%p240) target = $region40
      $region39: #{tpu_custom_call.1} parent=5 // pred_region
        %s243 = ssub.s32 %s11, 2
        // Predicated region
        $region41: #{tpu_custom_call.1} parent=39 // pred_check
          %p244 = pneg %p108
        $region42: #{tpu_custom_call.1} parent=39 // pred_check_branch
          %246 = sbr.rel (%p244) target = $region44
        $region43: #{tpu_custom_call.1} parent=39 // pred_region
          %s247 = sand.u32 %s93, 1
          %s248 = scalar_lea.sflag [#allocation3], %s247
          %s249 = sand.u32 %s93, 1
          %s250 = smul.addr %s249, 8
          %s251 = scalar_lea.vmem [#allocation2], %s250
          %252 = dma.done %s248, 128
        $region44: #{tpu_custom_call.1} parent=39 // pred_fallthru
          _
      $region40: #{tpu_custom_call.1} parent=5 // pred_fallthru
        _
    $region6: #{tpu_custom_call.1} parent=1 // loop_footer
      %s15 = sadd.s32 1, %s11
    $region7: #{tpu_custom_call.1} parent=1 // loop_footer_branch
      %10 = sbr.rel target = $region3
    $region8: #{tpu_custom_call.1} parent=1 // loop_exit
      _
    %253 = vsyncpa [#allocation3], 1
    %s254 = scalar_lea.sflag [#allocation3], 1
    %255 = vsyncpa %s254, 1

</llo_original>
